<compile_context>
chip_gen: v5e
topology: v5e:2x2
jax: 0.10.0
libtpu: 0.0.40
codegen_flags: <defaults>
</compile_context>

<pallas_src>
import functools

import jax
import jax.numpy as jnp
from jax.experimental import pallas as pl
from jax.experimental.pallas import tpu as pltpu

_LANE = 128        # lane width (last dim of every tile)
_BLOCK_ROWS = 8    # sublane-aligned rows per grid step


# ----------------------------------------------------------------------------
# Fused Beta log-prob kernel.
#   coef_ref : SMEM f32[4] = [a - 1, b - 1, log_normalizer, 0]   (scalar prefetch)
#   x_ref    : VMEM f32[_BLOCK_ROWS, _LANE] sample tile in (0, 1)
#   out_ref  : VMEM f32[_BLOCK_ROWS, _LANE] log_prob tile
# log_prob(x) = (a-1)*log(x) + (b-1)*log(1-x) - [lgamma(a)+lgamma(b)-lgamma(a+b)]
# ----------------------------------------------------------------------------
def _beta_log_prob_kernel(coef_ref, x_ref, out_ref):
    am1 = coef_ref[0]        # a - 1   (f32 scalar from SMEM)
    bm1 = coef_ref[1]        # b - 1
    log_norm = coef_ref[2]   # lgamma(a) + lgamma(b) - lgamma(a + b)
    x = x_ref[...]
    out_ref[...] = am1 * jnp.log(x) + bm1 * jnp.log(1.0 - x) - log_norm


def _beta_log_prob_pallas(coef: jax.Array, x2: jax.Array) -> jax.Array:
    """coef: (4,) f32;  x2: (rows, 128) f32 with rows % _BLOCK_ROWS == 0."""
    rows = x2.shape[0]
    grid = (rows // _BLOCK_ROWS,)
    return pl.pallas_call(
        _beta_log_prob_kernel,
        out_shape=jax.ShapeDtypeStruct((rows, _LANE), jnp.float32),
        grid_spec=pltpu.PrefetchScalarGridSpec(
            num_scalar_prefetch=1,            # coef lands in SMEM before the grid
            grid=grid,
            in_specs=[pl.BlockSpec((_BLOCK_ROWS, _LANE), lambda i, _coef: (i, 0))],
            out_specs=pl.BlockSpec((_BLOCK_ROWS, _LANE), lambda i, _coef: (i, 0)),
        ),
        compiler_params=pltpu.CompilerParams(
            dimension_semantics=("parallel",),   # shard rows across TCs on v7x
        ),
    )(coef, x2)


@jax.jit
def _beta_log_prob_from_params(params: jax.Array, x: jax.Array) -> jax.Array:
    """params: (1, 2) raw [alpha, beta];  x: samples of any shape in (0, 1)."""
    alpha = params[0, 0]
    beta = params[0, 1]
    a = jnp.exp(alpha)
    b = jnp.exp(beta)
    log_norm = jax.lax.lgamma(a) + jax.lax.lgamma(b) - jax.lax.lgamma(a + b)
    coef = jnp.stack([a - 1.0, b - 1.0, log_norm,
                      jnp.zeros((), jnp.float32)]).astype(jnp.float32)

    # Flatten + pad to a lane-dense (rows, 128) slab, rows multiple of 8.
    orig_shape = x.shape
    n = x.size
    tile = _BLOCK_ROWS * _LANE
    n_pad = ((n + tile - 1) // tile) * tile
    xf = jnp.pad(x.reshape(-1).astype(jnp.float32), (0, n_pad - n),
                 constant_values=0.5)          # pad with a valid (0,1) value
    x2 = xf.reshape(n_pad // _LANE, _LANE)

    out = _beta_log_prob_pallas(coef, x2)
    return out.reshape(-1)[:n].reshape(orig_shape)


@jax.jit
def _concentrations(params: jax.Array) -> jax.Array:
    # Two exp ops: folded into the jit as plain jnp.exp (no Pallas launch cost).
    return jnp.exp(params)                     # packed (1, 2) — no scalar slicing


# ----------------------------------------------------------------------------
# Lightweight JAX-side Beta distribution (equivalent of torch.distributions.Beta)
# ----------------------------------------------------------------------------
class Beta:
    def __init__(self, packed_params: jax.Array):
        self._params = packed_params           # raw (1, 2) [alpha, beta]
        self._conc = None

    @property
    def _concentrations(self) -> jax.Array:
        if self._conc is None:
            self._conc = _concentrations(self._params)
        return self._conc

    @property
    def concentration1(self) -> jax.Array:     # "alpha" of the Beta distribution
        return self._concentrations[0, 0]

    @property
    def concentration0(self) -> jax.Array:     # "beta" of the Beta distribution
        return self._concentrations[0, 1]

    @property
    def mean(self) -> jax.Array:
        c = self._concentrations
        return c[0, 0] / (c[0, 0] + c[0, 1])

    def log_prob(self, x: jax.Array) -> jax.Array:
        # Fused Pallas kernel over the sample batch (the real VI workload).
        return _beta_log_prob_from_params(self._params, x)


# ----------------------------------------------------------------------------
# Model wrapper (mirrors the nn.Module)
# ----------------------------------------------------------------------------
class Model:
    def __init__(self, alpha: float, beta: float):
        # nn.Parameter(torch.tensor(alpha)) / nn.Parameter(torch.tensor(beta))
        # packed into one (1, 2) f32 array: [[alpha, beta]]
        self.params = jnp.array([[alpha, beta]], dtype=jnp.float32)

    def forward(self) -> Beta:
        # Beta(alpha.exp(), beta.exp()) — concentrations materialized lazily.
        return Beta(self.params)

    __call__ = forward


# ----------------------------------------------------------------------------
if __name__ == "__main__":
    key = jax.random.PRNGKey(0)
    ka, kb, kx = jax.random.split(key, 3)

    # Deterministic parameter init (the "inputs" of the module's __init__).
    alpha_init = float(jax.random.normal(ka, ()))
    beta_init = float(jax.random.normal(kb, ()))

    model = Model(alpha_init, beta_init)
    dist = model()

    # Small lane-dense sample batch for the fused log_prob kernel.
    x = jax.random.uniform(kx, (32, 128), dtype=jnp.float32,
                           minval=1e-6, maxval=1.0 - 1e-6)

    lp = jax.block_until_ready(dist.log_prob(x))        # runs the Pallas kernel
    c1 = jax.block_until_ready(dist.concentration1)
    c0 = jax.block_until_ready(dist.concentration0)

    # Reference checks against plain JAX.
    expected_conc = jnp.exp(model.params)
    assert jnp.allclose(c1, expected_conc[0, 0], rtol=1e-6, atol=1e-6)
    assert jnp.allclose(c0, expected_conc[0, 1], rtol=1e-6, atol=1e-6)

    a_ref = jnp.exp(jnp.float32(alpha_init))
    b_ref = jnp.exp(jnp.float32(beta_init))
    log_norm_ref = (jax.lax.lgamma(a_ref) + jax.lax.lgamma(b_ref)
                    - jax.lax.lgamma(a_ref + b_ref))
    lp_ref = (a_ref - 1.0) * jnp.log(x) + (b_ref - 1.0) * jnp.log(1.0 - x) - log_norm_ref
    assert lp.shape == x.shape
    assert jnp.allclose(lp, lp_ref, rtol=1e-5, atol=1e-5)

    print("KERNEL_OK")
</pallas_src>

<mosaic_0001>
module attributes {stable_mosaic.version = 11 : i64} {
  func.func @_beta_log_prob_kernel(%arg0: i32, %arg1: memref<4xf32, #tpu.memory_space<smem>>, %arg2: memref<8x128xf32, #tpu.memory_space<vmem>>, %arg3: memref<8x128xf32, #tpu.memory_space<vmem>>) attributes {dimension_semantics = [#tpu.dimension_semantics<parallel>], iteration_bounds = array<i64: 4>, scalar_prefetch = 1 : i64, scratch_operands = 0 : i64, tpu.core_type = #tpu.core_type<tc>, window_params = [{transform_indices = @transform_0, window_bounds = array<i64: 8, 128>}, {transform_indices = @transform_1, window_bounds = array<i64: 8, 128>}]} {
    %c0 = arith.constant 0 : index
    %0 = memref.load %arg1[%c0] : memref<4xf32, #tpu.memory_space<smem>>
    %c1 = arith.constant 1 : index
    %1 = memref.load %arg1[%c1] : memref<4xf32, #tpu.memory_space<smem>>
    %c2 = arith.constant 2 : index
    %2 = memref.load %arg1[%c2] : memref<4xf32, #tpu.memory_space<smem>>
    %c0_0 = arith.constant 0 : index
    %c0_1 = arith.constant 0 : index
    %3 = vector.load %arg2[%c0_0, %c0_1] : memref<8x128xf32, #tpu.memory_space<vmem>>, vector<8x128xf32>
    %4 = math.log %3 : vector<8x128xf32>
    %5 = vector.broadcast %0 : f32 to vector<8x128xf32>
    %6 = arith.mulf %5, %4 : vector<8x128xf32>
    %cst = arith.constant 1.000000e+00 : f32
    %7 = vector.broadcast %cst : f32 to vector<8x128xf32>
    %8 = arith.subf %7, %3 : vector<8x128xf32>
    %9 = math.log %8 : vector<8x128xf32>
    %10 = vector.broadcast %1 : f32 to vector<8x128xf32>
    %11 = arith.mulf %10, %9 : vector<8x128xf32>
    %12 = arith.addf %6, %11 : vector<8x128xf32>
    %13 = vector.broadcast %2 : f32 to vector<8x128xf32>
    %14 = arith.subf %12, %13 : vector<8x128xf32>
    %c0_2 = arith.constant 0 : index
    %c0_3 = arith.constant 0 : index
    %15 = vector.load %arg3[%c0_2, %c0_3] : memref<8x128xf32, #tpu.memory_space<vmem>>, vector<8x128xf32>
    tpu.vector_store %arg3[%c0_2, %c0_3], %14 {strides = array<i32>} : memref<8x128xf32, #tpu.memory_space<vmem>>, vector<8x128xf32>,
    return
  }
  func.func @transform_0(%arg0: i32, %arg1: memref<4xf32, #tpu.memory_space<smem>>) -> (i32, i32) {
    %c0_i32 = arith.constant 0 : i32
    %c0_i32_0 = arith.constant 0 : i32
    return %arg0, %c0_i32 : i32, i32
  }
  func.func @transform_1(%arg0: i32, %arg1: memref<4xf32, #tpu.memory_space<smem>>) -> (i32, i32) {
    %c0_i32 = arith.constant 0 : i32
    %c0_i32_0 = arith.constant 0 : i32
    return %arg0, %c0_i32 : i32, i32
  }
}

</mosaic_0001>

<llo_original>
// kernel: _beta_log_prob_from_params.1
$region0: #{_beta_log_prob_from_params.1}
  #allocation0 [shape = 'u32[]', space=smem, size = 0x4, offset = 0x4, fixed_abs, tag = 'smem constant byte address 0x4 - core index']
  #allocation1 [shape = 'u32[72,128]{1,0:T(1,128)}', space=vmem, size = 0x9000, scoped, tag = 'internal scratch']
  #allocation2 [shape = 's32[1]{0}', space=sflag, size = 0x4, scoped, tag = 'scoped memory for _beta_log_prob_from_params.1']
  #allocation3 [shape = 'u8[512]{0}', space=smem, size = 0x200, scoped, tag = 'prefetched SMEM operand 0']
  %s0 = inlined_call_operand.vmem [shape: f32[4], index: 0, kind: input, shape index: {}]
  %s1 = inlined_call_operand.vmem [shape: f32[32,128], index: 1, kind: input, shape index: {}]
  %s2 = inlined_call_operand.hbm [shape: f32[32,128], index: 2, kind: output, shape index: {}]
  %s3 = sld [smem:[#allocation0]]
  $region37: #{_beta_log_prob_from_params.1} parent=0
    _
  %s5 = ssub.s32 1, %s3
  %s6 = scalar_select 0, %s5, %s3
  %s8 = sshll.u32 %s0, 4
  %s9 = int_to_ptr.vmem [resolvable:$true] %s8
  %11 = dma.vmem_to_smem %s9, 16, [#allocation3], [#allocation2]
  %13 = dma.done [#allocation2], 16
  %14 = sfence
  $region1: #{_beta_log_prob_from_params.1} parent=0
    #allocation4 [shape = 'u8[8192]{0}', space=vmem, size = 0x2000, scoped, tag = 'output window, operand 0']
    #allocation5 [shape = 's32[2]{0}', space=sflag, size = 0x8, scoped, tag = 'scoped memory for _beta_log_prob_from_params.1']
    %15 = vsyncpa [#allocation5], 0
    %s16 = scalar_lea.sflag [#allocation5], 1
    %17 = vsyncpa %s16, 0
    loop: start=0, step=1, limit=6
    $region2: #{_beta_log_prob_from_params.1} parent=1 // loop_pre_header
      _
    $region3: #{_beta_log_prob_from_params.1} parent=1 // loop_header
      %s19 = sphi 0, %s23
      %p20 = scmp.ge.s32.totalorder %s19, 6
      %s29 = sphi 0, %s31
      %s32 = sphi 0, %s29
      %s33 = sphi 0, %s32
      %s49 = sphi 0, %s33
      %s55 = sphi 0, %s57
      %s58 = sphi 0, %s55
      %s59 = sphi 0, %s58
      %s75 = sphi 0, %s59
    $region4: #{_beta_log_prob_from_params.1} parent=1 // loop_header_branch
      %22 = sbr.rel (%p20) target = $region8
    $region5: #{_beta_log_prob_from_params.1} parent=1 // loop_body
      %s24 = ssub.s32 %s19, 1
      %s25 = ssub.s32 %s19, 2
      %s26 = sadd.s32 %s19, 1
      %s27 = ssub.s32 %s19, %s26
      %p28 = scmp.eq.s32.totalorder %s27, 0
      %s30 = sadd.s32 %s29, 1
      %s31 = scalar_select %p28, %s29, %s30
      %p34 = pneg %p28
      %p35 = scmp.eq.s32.totalorder %s19, 3
      %p36 = por %p34, %p35
      %p37 = scmp.ne.s32.totalorder %s29, %s32
      %p38 = scmp.eq.s32.totalorder %s19, 0
      %p39 = por %p37, %p38
      %p40 = scmp.ne.s32.totalorder %s29, %s32
      %p41 = scmp.eq.s32.totalorder %s24, 3
      %p42 = por %p40, %p41
      %p43 = scmp.ne.s32.totalorder %s32, %s33
      %p44 = scmp.eq.s32.totalorder %s24, 0
      %p45 = por %p43, %p44
      %p46 = scmp.ne.s32.totalorder %s32, %s33
      %p47 = scmp.eq.s32.totalorder %s25, 3
      %p48 = por %p46, %p47
      %p50 = scmp.ne.s32.totalorder %s33, %s49
      %p51 = scmp.eq.s32.totalorder %s25, 0
      %p52 = por %p50, %p51
      %s53 = ssub.s32 %s19, %s26
      %p54 = scmp.eq.s32.totalorder %s53, 0
      %s56 = sadd.s32 %s55, 1
      %s57 = scalar_select %p54, %s55, %s56
      %p60 = pneg %p54
      %p61 = scmp.eq.s32.totalorder %s19, 3
      %p62 = por %p60, %p61
      %p63 = scmp.ne.s32.totalorder %s55, %s58
      %p64 = scmp.eq.s32.totalorder %s19, 0
      %p65 = por %p63, %p64
      %p66 = scmp.ne.s32.totalorder %s55, %s58
      %p67 = scmp.eq.s32.totalorder %s24, 3
      %p68 = por %p66, %p67
      %p69 = scmp.ne.s32.totalorder %s58, %s59
      %p70 = scmp.eq.s32.totalorder %s24, 0
      %p71 = por %p69, %p70
      %p72 = scmp.ne.s32.totalorder %s58, %s59
      %p73 = scmp.eq.s32.totalorder %s25, 3
      %p74 = por %p72, %p73
      %p76 = scmp.ne.s32.totalorder %s59, %s75
      %p77 = scmp.eq.s32.totalorder %s25, 0
      %p78 = por %p76, %p77
      %p79 = scmp.le.s32.totalorder 1, %s19
      %p80 = scmp.lt.s32.totalorder %s19, 5
      %p81 = pnand %p79, %p80
      %p82 = pneg %p81
      // Predicated region
      $region9: #{_beta_log_prob_from_params.1} parent=5 // pred_check
        _
      $region10: #{_beta_log_prob_from_params.1} parent=5 // pred_check_branch
        %84 = sbr.rel (%p81) target = $region12
      $region11: #{_beta_log_prob_from_params.1} parent=5 // pred_region
        %s85 = ssub.s32 %s19, 1
      $region12: #{_beta_log_prob_from_params.1} parent=5 // pred_fallthru
        _
      %p86 = scmp.lt.s32.totalorder %s19, 4
      // Predicated region
      $region13: #{_beta_log_prob_from_params.1} parent=5 // pred_check
        %p87 = pneg %p86
      $region14: #{_beta_log_prob_from_params.1} parent=5 // pred_check_branch
        %89 = sbr.rel (%p87) target = $region16
      $region15: #{_beta_log_prob_from_params.1} parent=5 // pred_region
        // Predicated region
        $region17: #{_beta_log_prob_from_params.1} parent=15 // pred_check
          %p90 = pneg %p39
        $region18: #{_beta_log_prob_from_params.1} parent=15 // pred_check_branch
          %92 = sbr.rel (%p90) target = $region20
        $region19: #{_beta_log_prob_from_params.1} parent=15 // pred_region
          %p93 = scmp.lt.s32.totalorder %s19, 3
          %s94 = scalar_select %p93, %s19, 3
          %s95 = smul.addr %s94, 8
          %s96 = scalar_lea.vmem %s1, %s95
        $region20: #{_beta_log_prob_from_params.1} parent=15 // pred_fallthru
          _
      $region16: #{_beta_log_prob_from_params.1} parent=5 // pred_fallthru
        _
      %p97 = scmp.le.s32.totalorder 1, %s19
      %p98 = scmp.lt.s32.totalorder %s19, 5
      %p99 = pnand %p97, %p98
      %p100 = pneg %p99
      // Predicated region
      $region21: #{_beta_log_prob_from_params.1} parent=5 // pred_check
        _
      $region22: #{_beta_log_prob_from_params.1} parent=5 // pred_check_branch
        %102 = sbr.rel (%p99) target = $region24
      $region23: #{_beta_log_prob_from_params.1} parent=5 // pred_region
        %s103 = ssub.s32 %s19, 1
        %p104 = scmp.lt.s32.totalorder %s24, 3
        %s105 = scalar_select %p104, %s24, 3
        %s106 = smul.addr %s105, 8
        %s107 = scalar_lea.vmem %s1, %s106
        %p108 = pneg %p45
        %p109 = pneg %p42
        %p110 = pneg %p71
        %p111 = pneg %p68
        %s112 = sand.u32 %s58, 1
        %s113 = scalar_lea.sflag [#allocation5], %s112
        %s114 = sand.u32 %s58, 1
        %s115 = smul.addr %s114, 8
        %s116 = scalar_lea.vmem [#allocation4], %s115
        %p117 = scmp.lt.s32.totalorder %s24, 3
        %s118 = scalar_select %p117, %s24, 3
        %s119 = smul.addr %s118, 8
        %s120 = scalar_lea.vmem %s1, %s119
        %s121 = sld [smem:[#allocation3]]
        %s122 = sld [smem:[#allocation3 + $0x1]]
        %s123 = sld [smem:[#allocation3 + $0x2]]
        %v124 = vld [vmem:[%s120] sm:$0xff]
        %v125 = vlog2.pop %v124
        %v126 = vmul.f32 %v125, 0.6931472
        %v127 = vstv %s121
        %v128 = vmul.f32 %v127, %v126
        %v129 = vsub.f32 1.0, %v124
        %v130 = vlog2.pop %v129
        %v131 = vmul.f32 %v130, 0.6931472
        %v132 = vstv %s122
        %v133 = vmul.f32 %v132, %v131
        %v134 = vadd.f32 %v128, %v133
        %v135 = vstv %s123
        %v136 = vsub.f32 %v134, %v135
        %137 = vst [vmem:[%s116] sm:$0xff] %v136
        %s138 = sand.u32 %s58, 1
        %s139 = scalar_lea.sflag [#allocation5], %s138
        %s140 = sand.u32 %s58, 1
        %s141 = smul.addr %s140, 8
        %s142 = scalar_lea.vmem [#allocation4], %s141
        // Predicated region
        $region25: #{_beta_log_prob_from_params.1} parent=23 // pred_check
          %p143 = pneg %p68
        $region26: #{_beta_log_prob_from_params.1} parent=23 // pred_check_branch
          %145 = sbr.rel (%p143) target = $region28
        $region27: #{_beta_log_prob_from_params.1} parent=23 // pred_region
          %147 = vsyncadd %s139, 0
          %s148 = smul.addr %s24, 8
          %s149 = scalar_lea.hbm %s2, %s148
          %s151 = sshll.u32 %s142, 4
          %s152 = int_to_ptr.vmem [resolvable:$true] %s151
          %s153 = sshll.u32 %s149, 4
          %s154 = int_to_ptr.hbm [resolvable:$true] %s153
          %156 = dma.vmem_to_hbm [thread:$0]  %s152, 128, %s154, %s139
        $region28: #{_beta_log_prob_from_params.1} parent=23 // pred_fallthru
          _
      $region24: #{_beta_log_prob_from_params.1} parent=5 // pred_fallthru
        _
      %p157 = scmp.le.s32.totalorder 2, %s19
      // Predicated region
      $region29: #{_beta_log_prob_from_params.1} parent=5 // pred_check
        %p158 = pneg %p157
      $region30: #{_beta_log_prob_from_params.1} parent=5 // pred_check_branch
        %160 = sbr.rel (%p158) target = $region32
      $region31: #{_beta_log_prob_from_params.1} parent=5 // pred_region
        %s161 = ssub.s32 %s19, 2
        // Predicated region
        $region33: #{_beta_log_prob_from_params.1} parent=31 // pred_check
          %p162 = pneg %p74
        $region34: #{_beta_log_prob_from_params.1} parent=31 // pred_check_branch
          %164 = sbr.rel (%p162) target = $region36
        $region35: #{_beta_log_prob_from_params.1} parent=31 // pred_region
          %s165 = sand.u32 %s59, 1
          %s166 = scalar_lea.sflag [#allocation5], %s165
          %s167 = sand.u32 %s59, 1
          %s168 = smul.addr %s167, 8
          %s169 = scalar_lea.vmem [#allocation4], %s168
          %171 = dma.done %s166, 128
        $region36: #{_beta_log_prob_from_params.1} parent=31 // pred_fallthru
          _
      $region32: #{_beta_log_prob_from_params.1} parent=5 // pred_fallthru
        _
    $region6: #{_beta_log_prob_from_params.1} parent=1 // loop_footer
      %s23 = sadd.s32 1, %s19
    $region7: #{_beta_log_prob_from_params.1} parent=1 // loop_footer_branch
      %18 = sbr.rel target = $region3
    $region8: #{_beta_log_prob_from_params.1} parent=1 // loop_exit
      _
    %172 = vsyncpa [#allocation5], 1
    %s173 = scalar_lea.sflag [#allocation5], 1
    %174 = vsyncpa %s173, 1

</llo_original>
